<compile_context>
chip_gen: v5e
topology: v5e:2x2
jax: 0.10.0
libtpu: 0.0.40
codegen_flags: <defaults>
</compile_context>

<pallas_src>
import functools

import jax
import jax.numpy as jnp
from jax.experimental import pallas as pl
from jax.experimental.pallas import tpu as pltpu


def _round_up(v, m):
    return (v + m - 1) // m * m


def _mlp_kernel(n_layers, *refs):
    """Fused MLP over one batch tile.

    refs = (x_ref, w0, b0, ..., w_{L-1}, b_{L-1}, h_out_ref, y_out_ref)
    Hidden activation = ReLU on all but the last layer; no final activation.
    Activations stay f32; only the MXU operands are cast to bf16.
    """
    x_ref = refs[0]
    param_refs = refs[1:1 + 2 * n_layers]
    h_out_ref = refs[1 + 2 * n_layers]
    y_out_ref = refs[2 + 2 * n_layers]

    act = x_ref[...].astype(jnp.float32)            # [TB, d0] f32
    for i in range(n_layers - 1):
        w = param_refs[2 * i][...]                  # bf16 [d_i, d_{i+1}]
        b = param_refs[2 * i + 1][...]              # f32  [1,  d_{i+1}]
        acc = jnp.dot(act.astype(jnp.bfloat16), w,
                      preferred_element_type=jnp.float32) + b
        act = jnp.maximum(acc, 0.0)                 # hidden_activation = F.relu (f32, VPU)
        # TODO(synk): nn.Dropout only applies in training mode; eval forward skips it.
    h_out_ref[...] = act.astype(h_out_ref.dtype)    # output.h (== raw x if n_layers == 1)

    w = param_refs[-2][...]
    b = param_refs[-1][...]
    y = jnp.dot(act.astype(jnp.bfloat16), w, preferred_element_type=jnp.float32) + b
    y_out_ref[...] = y.astype(y_out_ref.dtype)      # final_activation = None


def nn_forward(x, params, *, block_batch=512, out_dtype=None):
    """Fused eval-mode forward.

    x:      [batch, in_dim] float32 (passed to the kernel unmodified)
    params: list of (W [in, out], b [out]) pairs -- hidden layers then final layer
            (W stored transposed vs. PyTorch's [out, in] so y = x @ W + b).
    Returns (h, y) at their true (unpadded) shapes, dtype out_dtype (default x.dtype).
    """
    n_layers = len(params)
    batch, in_dim = x.shape
    out_dtype = x.dtype if out_dtype is None else jnp.dtype(out_dtype)

    dims = [in_dim] + [w.shape[1] for (w, _) in params]
    hid_dim = dims[-2]                 # width of the hidden representation h
    out_dim = dims[-1]

    # Batch tiling: rows per grid step (multiple of 8 sublanes). Large tiles
    # amortize per-step overhead on single-TC v5e/v6e; if the whole batch would
    # fit one tile, split into >=2 so both v7x TensorCores get work. The last
    # (ragged) block is masked by Pallas -- no batch padding, no wrapper copy.
    tb = min(_round_up(batch, 8), _round_up(block_batch, 8))
    if pl.cdiv(batch, tb) == 1 and batch >= 16:
        tb = _round_up(pl.cdiv(batch, 2), 8)
    grid = (pl.cdiv(batch, tb),)

    flat_params = []
    in_specs = [pl.BlockSpec((tb, in_dim), lambda i: (i, 0))]     # x at true width, f32
    for (w, b) in params:
        flat_params.append(w.astype(jnp.bfloat16))                # one-time tiny host cast
        flat_params.append(b.astype(jnp.float32).reshape(1, -1))
        # Constant index_map -> weights/biases stay VMEM-resident across grid steps.
        in_specs.append(pl.BlockSpec(w.shape, lambda i: (0, 0)))
        in_specs.append(pl.BlockSpec((1, b.shape[0]), lambda i: (0, 0)))
        # TODO(synk): for layer widths whose weights outgrow VMEM, add a K/N-tiled
        # accumulate grid axis (pl.when init/finalize) instead of whole-W dots.

    out_shape = (
        jax.ShapeDtypeStruct((batch, hid_dim), out_dtype),        # output.h
        jax.ShapeDtypeStruct((batch, out_dim), out_dtype),        # output.x
    )
    out_specs = (
        pl.BlockSpec((tb, hid_dim), lambda i: (i, 0)),
        pl.BlockSpec((tb, out_dim), lambda i: (i, 0)),
    )

    # VMEM budget: resident weights (conservatively x2 for pipeline buffering),
    # double-buffered x/h/y tiles, plus intermediate f32 activation tiles.
    weight_bytes = sum(p.size * p.dtype.itemsize for p in flat_params)
    out_isz = out_dtype.itemsize
    act_bytes = tb * (2 * (in_dim * 4 + hid_dim * out_isz + out_dim * out_isz)
                      + 2 * max(dims) * 4)
    est = 2 * weight_bytes + act_bytes
    try:
        vmem_capacity = pltpu.get_tpu_info().vmem_capacity_bytes
    except Exception:                                 # pragma: no cover
        vmem_capacity = 64 * 1024 * 1024              # assume smallest (v7x)
    vmem_cap = max(int(0.75 * vmem_capacity), 32 * 1024 * 1024)   # headroom for Mosaic scratch
    vmem_limit = int(min(max(est, 32 * 1024 * 1024), vmem_cap))

    kernel = functools.partial(_mlp_kernel, n_layers)
    h, y = pl.pallas_call(
        kernel,
        grid=grid,
        out_shape=out_shape,
        in_specs=in_specs,
        out_specs=out_specs,
        compiler_params=pltpu.CompilerParams(
            dimension_semantics=("parallel",),        # batch tiles are independent
            vmem_limit_bytes=vmem_limit,
        ),
    )(x, *flat_params)
    return h, y                                        # true shapes -- no slicing needed


def init_linear_params(key, in_dim, out_dim, dtype=jnp.float32):
    """Deterministic init mimicking torch.nn.Linear default (uniform +-1/sqrt(in))."""
    kw, kb = jax.random.split(key)
    bound = 1.0 / jnp.sqrt(jnp.asarray(in_dim, dtype))
    w = jax.random.uniform(kw, (in_dim, out_dim), dtype, -bound, bound)
    b = jax.random.uniform(kb, (out_dim,), dtype, -bound, bound)
    return w, b


if __name__ == "__main__":
    # NN(input_shape=32, output_size=16, hidden_layers=[64, 32]) -- FCN path, eval mode.
    input_shape = 32
    hidden_layers = [64, 32]
    output_size = 16

    key = jax.random.PRNGKey(0)
    keys = jax.random.split(key, 3 + len(hidden_layers) + 1)
    k_x = keys[:3]
    k_layers = keys[3:]

    params = []
    cur = input_shape
    for kd, d in zip(k_layers, hidden_layers + [output_size]):
        params.append(init_linear_params(kd, cur, d))
        cur = d

    def ref_forward(xx):
        r = xx
        for (w, b) in params[:-1]:
            r = jnp.maximum(r @ w + b, 0.0)
        return r, r @ params[-1][0] + params[-1][1]

    # batch=8   : single grid step.
    # batch=500 : ragged (masked) last block + 2-step parallel grid (v7x 2-TC path).
    # batch=512 : bf16 outputs (halved writeback), 2-step grid.
    cases = [(8, k_x[0], None), (500, k_x[1], None), (512, k_x[2], jnp.bfloat16)]
    for batch, xkey, odt in cases:
        x = jax.random.normal(xkey, (batch, input_shape), jnp.float32)
        h, y = nn_forward(x, params, out_dtype=odt)
        jax.block_until_ready((h, y))

        ref_h, ref_y = ref_forward(x)
        assert h.shape == (batch, hidden_layers[-1])
        assert y.shape == (batch, output_size)
        # bf16 MXU operands (f32 accumulation); extra slack when outputs are bf16.
        tol = 5e-2 if odt is None else 1e-1
        assert jnp.allclose(h.astype(jnp.float32), ref_h, atol=tol, rtol=tol)
        assert jnp.allclose(y.astype(jnp.float32), ref_y, atol=tol, rtol=tol)

    print("KERNEL_OK")
</pallas_src>

<mosaic_0001>
module attributes {stable_mosaic.version = 11 : i64} {
  func.func @_mlp_kernel(%arg0: i32, %arg1: memref<8x32xf32, #tpu.memory_space<vmem>>, %arg2: memref<32x64xbf16, #tpu.memory_space<vmem>>, %arg3: memref<1x64xf32, #tpu.memory_space<vmem>>, %arg4: memref<64x32xbf16, #tpu.memory_space<vmem>>, %arg5: memref<1x32xf32, #tpu.memory_space<vmem>>, %arg6: memref<32x16xbf16, #tpu.memory_space<vmem>>, %arg7: memref<1x16xf32, #tpu.memory_space<vmem>>, %arg8: memref<8x32xf32, #tpu.memory_space<vmem>>, %arg9: memref<8x16xf32, #tpu.memory_space<vmem>>) attributes {dimension_semantics = [#tpu.dimension_semantics<parallel>], iteration_bounds = array<i64: 1>, scalar_prefetch = 0 : i64, scratch_operands = 0 : i64, tpu.core_type = #tpu.core_type<tc>, window_params = [{transform_indices = @transform_0, window_bounds = array<i64: 8, 32>}, {pipeline_mode = #tpu.pipeline_mode<synchronous>, transform_indices = @transform_1, window_bounds = array<i64: 32, 64>}, {pipeline_mode = #tpu.pipeline_mode<synchronous>, transform_indices = @transform_2, window_bounds = array<i64: 1, 64>}, {pipeline_mode = #tpu.pipeline_mode<synchronous>, transform_indices = @transform_3, window_bounds = array<i64: 64, 32>}, {pipeline_mode = #tpu.pipeline_mode<synchronous>, transform_indices = @transform_4, window_bounds = array<i64: 1, 32>}, {pipeline_mode = #tpu.pipeline_mode<synchronous>, transform_indices = @transform_5, window_bounds = array<i64: 32, 16>}, {pipeline_mode = #tpu.pipeline_mode<synchronous>, transform_indices = @transform_6, window_bounds = array<i64: 1, 16>}, {transform_indices = @transform_7, window_bounds = array<i64: 8, 32>}, {transform_indices = @transform_8, window_bounds = array<i64: 8, 16>}]} {
    %c0 = arith.constant 0 : index
    %c0_0 = arith.constant 0 : index
    %0 = vector.load %arg1[%c0, %c0_0] : memref<8x32xf32, #tpu.memory_space<vmem>>, vector<8x32xf32>
    %c0_1 = arith.constant 0 : index
    %c0_2 = arith.constant 0 : index
    %1 = vector.load %arg2[%c0_1, %c0_2] : memref<32x64xbf16, #tpu.memory_space<vmem>>, vector<32x64xbf16>
    %c0_3 = arith.constant 0 : index
    %c0_4 = arith.constant 0 : index
    %2 = vector.load %arg3[%c0_3, %c0_4] : memref<1x64xf32, #tpu.memory_space<vmem>>, vector<1x64xf32>
    %3 = arith.truncf %0 : vector<8x32xf32> to vector<8x32xbf16>
    %cst = arith.constant dense<0.000000e+00> : vector<8x64xf32>
    %4 = tpu.matmul %3, %1, %cst {dimension_numbers = #tpu.dot_dimension_numbers<[1], [0], [0], [1], [0, 0, 1, 1], [], []>} : vector<8x32xbf16>, vector<32x64xbf16>, vector<8x64xf32> -> vector<8x64xf32>
    %5 = vector.broadcast %2 : vector<1x64xf32> to vector<8x64xf32>
    %6 = arith.addf %4, %5 : vector<8x64xf32>
    %cst_5 = arith.constant 0.000000e+00 : f32
    %7 = vector.broadcast %cst_5 : f32 to vector<8x64xf32>
    %8 = arith.maximumf %6, %7 : vector<8x64xf32>
    %c0_6 = arith.constant 0 : index
    %c0_7 = arith.constant 0 : index
    %9 = vector.load %arg4[%c0_6, %c0_7] : memref<64x32xbf16, #tpu.memory_space<vmem>>, vector<64x32xbf16>
    %c0_8 = arith.constant 0 : index
    %c0_9 = arith.constant 0 : index
    %10 = vector.load %arg5[%c0_8, %c0_9] : memref<1x32xf32, #tpu.memory_space<vmem>>, vector<1x32xf32>
    %11 = arith.truncf %8 : vector<8x64xf32> to vector<8x64xbf16>
    %cst_10 = arith.constant dense<0.000000e+00> : vector<8x32xf32>
    %12 = tpu.matmul %11, %9, %cst_10 {dimension_numbers = #tpu.dot_dimension_numbers<[1], [0], [0], [1], [0, 0, 1, 1], [], []>} : vector<8x64xbf16>, vector<64x32xbf16>, vector<8x32xf32> -> vector<8x32xf32>
    %13 = vector.broadcast %10 : vector<1x32xf32> to vector<8x32xf32>
    %14 = arith.addf %12, %13 : vector<8x32xf32>
    %cst_11 = arith.constant 0.000000e+00 : f32
    %15 = vector.broadcast %cst_11 : f32 to vector<8x32xf32>
    %16 = arith.maximumf %14, %15 : vector<8x32xf32>
    %c0_12 = arith.constant 0 : index
    %c0_13 = arith.constant 0 : index
    %17 = vector.load %arg8[%c0_12, %c0_13] : memref<8x32xf32, #tpu.memory_space<vmem>>, vector<8x32xf32>
    tpu.vector_store %arg8[%c0_12, %c0_13], %16 {strides = array<i32>} : memref<8x32xf32, #tpu.memory_space<vmem>>, vector<8x32xf32>,
    %c0_14 = arith.constant 0 : index
    %c0_15 = arith.constant 0 : index
    %18 = vector.load %arg6[%c0_14, %c0_15] : memref<32x16xbf16, #tpu.memory_space<vmem>>, vector<32x16xbf16>
    %c0_16 = arith.constant 0 : index
    %c0_17 = arith.constant 0 : index
    %19 = vector.load %arg7[%c0_16, %c0_17] : memref<1x16xf32, #tpu.memory_space<vmem>>, vector<1x16xf32>
    %20 = arith.truncf %16 : vector<8x32xf32> to vector<8x32xbf16>
    %cst_18 = arith.constant dense<0.000000e+00> : vector<8x16xf32>
    %21 = tpu.matmul %20, %18, %cst_18 {dimension_numbers = #tpu.dot_dimension_numbers<[1], [0], [0], [1], [0, 0, 1, 1], [], []>} : vector<8x32xbf16>, vector<32x16xbf16>, vector<8x16xf32> -> vector<8x16xf32>
    %22 = vector.broadcast %19 : vector<1x16xf32> to vector<8x16xf32>
    %23 = arith.addf %21, %22 : vector<8x16xf32>
    %c0_19 = arith.constant 0 : index
    %c0_20 = arith.constant 0 : index
    %24 = vector.load %arg9[%c0_19, %c0_20] : memref<8x16xf32, #tpu.memory_space<vmem>>, vector<8x16xf32>
    tpu.vector_store %arg9[%c0_19, %c0_20], %23 {strides = array<i32>} : memref<8x16xf32, #tpu.memory_space<vmem>>, vector<8x16xf32>,
    return
  }
  func.func @transform_0(%arg0: i32) -> (i32, i32) {
    %c0_i32 = arith.constant 0 : i32
    %c0_i32_0 = arith.constant 0 : i32
    return %arg0, %c0_i32 : i32, i32
  }
  func.func @transform_1(%arg0: i32) -> (i32, i32) {
    %c0_i32 = arith.constant 0 : i32
    %c0_i32_0 = arith.constant 0 : i32
    %c0_i32_1 = arith.constant 0 : i32
    return %c0_i32, %c0_i32_0 : i32, i32
  }
  func.func @transform_2(%arg0: i32) -> (i32, i32) {
    %c0_i32 = arith.constant 0 : i32
    %c0_i32_0 = arith.constant 0 : i32
    %c0_i32_1 = arith.constant 0 : i32
    return %c0_i32, %c0_i32_0 : i32, i32
  }
  func.func @transform_3(%arg0: i32) -> (i32, i32) {
    %c0_i32 = arith.constant 0 : i32
    %c0_i32_0 = arith.constant 0 : i32
    %c0_i32_1 = arith.constant 0 : i32
    return %c0_i32, %c0_i32_0 : i32, i32
  }
  func.func @transform_4(%arg0: i32) -> (i32, i32) {
    %c0_i32 = arith.constant 0 : i32
    %c0_i32_0 = arith.constant 0 : i32
    %c0_i32_1 = arith.constant 0 : i32
    return %c0_i32, %c0_i32_0 : i32, i32
  }
  func.func @transform_5(%arg0: i32) -> (i32, i32) {
    %c0_i32 = arith.constant 0 : i32
    %c0_i32_0 = arith.constant 0 : i32
    %c0_i32_1 = arith.constant 0 : i32
    return %c0_i32, %c0_i32_0 : i32, i32
  }
  func.func @transform_6(%arg0: i32) -> (i32, i32) {
    %c0_i32 = arith.constant 0 : i32
    %c0_i32_0 = arith.constant 0 : i32
    %c0_i32_1 = arith.constant 0 : i32
    return %c0_i32, %c0_i32_0 : i32, i32
  }
  func.func @transform_7(%arg0: i32) -> (i32, i32) {
    %c0_i32 = arith.constant 0 : i32
    %c0_i32_0 = arith.constant 0 : i32
    return %arg0, %c0_i32 : i32, i32
  }
  func.func @transform_8(%arg0: i32) -> (i32, i32) {
    %c0_i32 = arith.constant 0 : i32
    %c0_i32_0 = arith.constant 0 : i32
    return %arg0, %c0_i32 : i32, i32
  }
}

</mosaic_0001>

<llo_original>
// kernel: tpu_custom_call.1
$region0: #{tpu_custom_call.1}
  #allocation0 [shape = 'u32[]', space=smem, size = 0x4, offset = 0x4, fixed_abs, tag = 'smem constant byte address 0x4 - core index']
  #allocation1 [shape = 'u32[72,128]{1,0:T(1,128)}', space=vmem, size = 0x9000, scoped, tag = 'internal scratch']
  %s0 = inlined_call_operand.vmem [shape: f32[8,32], index: 0, kind: input, shape index: {}]
  %s1 = inlined_call_operand.vmem [shape: bf16[32,64], index: 1, kind: input, shape index: {}]
  %s2 = inlined_call_operand.vmem [shape: f32[1,64], index: 2, kind: input, shape index: {}]
  %s3 = inlined_call_operand.vmem [shape: bf16[64,32], index: 3, kind: input, shape index: {}]
  %s4 = inlined_call_operand.vmem [shape: f32[1,32], index: 4, kind: input, shape index: {}]
  %s5 = inlined_call_operand.vmem [shape: bf16[32,16], index: 5, kind: input, shape index: {}]
  %s6 = inlined_call_operand.vmem [shape: f32[1,16], index: 6, kind: input, shape index: {}]
  %s7 = inlined_call_operand.hbm [shape: f32[8,32], index: 7, kind: output, shape index: {0}]
  %s8 = inlined_call_operand.hbm [shape: f32[8,16], index: 8, kind: output, shape index: {1}]
  %9 = xla_tuple %s7, %s8
  %s10 = sld [smem:[#allocation0]]
  $region46: #{tpu_custom_call.1} parent=0
    _
  %s12 = ssub.s32 1, %s10
  %s13 = scalar_select 0, %s12, %s10
  $region1: #{tpu_custom_call.1} parent=0
    #allocation2 [shape = 'u8[4096]{0}', space=vmem, size = 0x1000, scoped, tag = 'output window, operand 0, single buffered']
    #allocation3 [shape = 's32[1]{0}', space=sflag, size = 0x4, scoped, tag = 'scoped memory for tpu_custom_call.1']
    #allocation4 [shape = 'u8[4096]{0}', space=vmem, size = 0x1000, scoped, tag = 'output window, operand 1, single buffered']
    #allocation5 [shape = 's32[1]{0}', space=sflag, size = 0x4, scoped, tag = 'scoped memory for tpu_custom_call.1']
    %14 = vsyncpa [#allocation3], 0
    %15 = vsyncpa [#allocation5], 0
    // Predicated region
    $region2: #{tpu_custom_call.1} parent=1 // pred_check
      _
    $region3: #{tpu_custom_call.1} parent=1 // pred_check_branch
      %17 = sbr.rel (0) target = $region5
    $region4: #{tpu_custom_call.1} parent=1 // pred_region
      _
    $region5: #{tpu_custom_call.1} parent=1 // pred_fallthru
      _
    // Predicated region
    $region6: #{tpu_custom_call.1} parent=1 // pred_check
      _
    $region7: #{tpu_custom_call.1} parent=1 // pred_check_branch
      %19 = sbr.rel (0) target = $region9
    $region8: #{tpu_custom_call.1} parent=1 // pred_region
      _
    $region9: #{tpu_custom_call.1} parent=1 // pred_fallthru
      _
    // Predicated region
    $region10: #{tpu_custom_call.1} parent=1 // pred_check
      _
    $region11: #{tpu_custom_call.1} parent=1 // pred_check_branch
      %21 = sbr.rel (0) target = $region13
    $region12: #{tpu_custom_call.1} parent=1 // pred_region
      _
    $region13: #{tpu_custom_call.1} parent=1 // pred_fallthru
      _
    // Predicated region
    $region14: #{tpu_custom_call.1} parent=1 // pred_check
      _
    $region15: #{tpu_custom_call.1} parent=1 // pred_check_branch
      %23 = sbr.rel (0) target = $region17
    $region16: #{tpu_custom_call.1} parent=1 // pred_region
      _
    $region17: #{tpu_custom_call.1} parent=1 // pred_fallthru
      _
    // Predicated region
    $region18: #{tpu_custom_call.1} parent=1 // pred_check
      _
    $region19: #{tpu_custom_call.1} parent=1 // pred_check_branch
      %25 = sbr.rel (0) target = $region21
    $region20: #{tpu_custom_call.1} parent=1 // pred_region
      _
    $region21: #{tpu_custom_call.1} parent=1 // pred_fallthru
      _
    // Predicated region
    $region22: #{tpu_custom_call.1} parent=1 // pred_check
      _
    $region23: #{tpu_custom_call.1} parent=1 // pred_check_branch
      %27 = sbr.rel (0) target = $region25
    $region24: #{tpu_custom_call.1} parent=1 // pred_region
      _
    $region25: #{tpu_custom_call.1} parent=1 // pred_fallthru
      _
    // Predicated region
    $region26: #{tpu_custom_call.1} parent=1 // pred_check
      _
    $region27: #{tpu_custom_call.1} parent=1 // pred_check_branch
      %29 = sbr.rel (0) target = $region29
    $region28: #{tpu_custom_call.1} parent=1 // pred_region
      _
    $region29: #{tpu_custom_call.1} parent=1 // pred_fallthru
      _
    %v31 = vld [vmem:[%s0] sm:$0xff]
    %v32 = vld [vmem:[%s1] sm:$0xf]
    %v33 = vld [vmem:[%s1 + $0x4] sm:$0xf]
    %v34 = vld [vmem:[%s1 + $0x8] sm:$0xf]
    %v35 = vld [vmem:[%s1 + $0xc] sm:$0xf]
    %v36 = vld [vmem:[%s2] sm:$0x1]
    %v37 = vpack.c.bf16 %v31, %v31
    %v39 = vperm.slane %v36, 0
    %v45 = vunpack.c.l.b16 %v32
    %v46 = vunpack.c.l.b16 %v33
    %v47 = vunpack.c.l.b16 %v34
    %v48 = vunpack.c.l.b16 %v35
    %v49 = vpack.c.b16 %v46, %v45
    %v50 = vpack.c.b16 %v48, %v47
    %vm53 = vcmask 261120
    %v55 = vsel %vm53, %v37, 0
    %57 = vmatpush.bf16.msra.mxu0 0
    %58 = vmatpush.bf16.msra.mxu0 0
    %59 = vmatpush.bf16.msra.mxu0 0
    %60 = vmatpush.bf16.msra.mxu0 0
    %61 = vmatpush.bf16.msra.mxu0 0
    %62 = vmatpush.bf16.msra.mxu0 0
    %63 = vmatpush.bf16.msra.mxu0 %v50
    %64 = vmatpush.bf16.msra.mxu0 %v49
    %65 = vmatmul.bf16.gmra.mxu0 %v55
    %v66 = vpop.f32.mrf.mxu0
    %v67 = vadd.f32 %v39, %v66
    %v68 = vpop.f32.mrf.mxu0
    %69 = vdwg.mxu0
    %v70 = vmax.f32 %v67, 0.0
    %v71 = vld [vmem:[%s3] sm:$0xf]
    %v72 = vld [vmem:[%s3 + $0x4] sm:$0xf]
    %v73 = vld [vmem:[%s3 + $0x8] sm:$0xf]
    %v74 = vld [vmem:[%s3 + $0xc] sm:$0xf]
    %v75 = vld [vmem:[%s3 + $0x10] sm:$0xf]
    %v76 = vld [vmem:[%s3 + $0x14] sm:$0xf]
    %v77 = vld [vmem:[%s3 + $0x18] sm:$0xf]
    %v78 = vld [vmem:[%s3 + $0x1c] sm:$0xf]
    %v79 = vld [vmem:[%s4] sm:$0x1]
    %v80 = vpack.c.bf16 %v70, %v70
    %v82 = vperm.slane %v79, 0
    %v92 = vunpack.c.l.b16 %v71
    %v93 = vunpack.c.l.b16 %v72
    %v94 = vunpack.c.l.b16 %v73
    %v95 = vunpack.c.l.b16 %v74
    %v96 = vunpack.c.l.b16 %v75
    %v97 = vunpack.c.l.b16 %v76
    %v98 = vunpack.c.l.b16 %v77
    %v99 = vunpack.c.l.b16 %v78
    %v100 = vpack.c.b16 %v93, %v92
    %v101 = vpack.c.b16 %v95, %v94
    %v102 = vpack.c.b16 %v97, %v96
    %v103 = vpack.c.b16 %v99, %v98
    %vm108 = vcmask 523264
    %v110 = vsel %vm108, %v80, 0
    %112 = vmatpush.bf16.msra.mxu0 0
    %113 = vmatpush.bf16.msra.mxu0 0
    %114 = vmatpush.bf16.msra.mxu0 0
    %115 = vmatpush.bf16.msra.mxu0 0
    %116 = vmatpush.bf16.msra.mxu0 %v103
    %117 = vmatpush.bf16.msra.mxu0 %v102
    %118 = vmatpush.bf16.msra.mxu0 %v101
    %119 = vmatpush.bf16.msra.mxu0 %v100
    %120 = vmatmul.bf16.gmra.mxu0 %v110
    %v121 = vpop.f32.mrf.mxu0
    %v122 = vadd.f32 %v82, %v121
    %v123 = vpop.f32.mrf.mxu0
    %124 = vdwg.mxu0
    %v125 = vmax.f32 %v122, 0.0
    %126 = vst.msk [vmem:[#allocation2] sm:$0xff] %vm53, %v125
    %v127 = vld [vmem:[%s5] sm:$0xf]
    %v128 = vld [vmem:[%s5 + $0x4] sm:$0xf]
    %v129 = vld [vmem:[%s5 + $0x8] sm:$0xf]
    %v130 = vld [vmem:[%s5 + $0xc] sm:$0xf]
    %v131 = vld [vmem:[%s6] sm:$0x1]
    %v132 = vpack.c.bf16 %v125, %v125
    %v134 = vperm.slane %v131, 0
    %v140 = vunpack.c.l.b16 %v127
    %v141 = vunpack.c.l.b16 %v128
    %v142 = vunpack.c.l.b16 %v129
    %v143 = vunpack.c.l.b16 %v130
    %v144 = vpack.c.b16 %v141, %v140
    %v145 = vpack.c.b16 %v143, %v142
    %v149 = vsel %vm53, %v132, 0
    %151 = vmatpush.bf16.msra.mxu0 0
    %152 = vmatpush.bf16.msra.mxu0 0
    %153 = vmatpush.bf16.msra.mxu0 0
    %154 = vmatpush.bf16.msra.mxu0 0
    %155 = vmatpush.bf16.msra.mxu0 0
    %156 = vmatpush.bf16.msra.mxu0 0
    %157 = vmatpush.bf16.msra.mxu0 %v145
    %158 = vmatpush.bf16.msra.mxu0 %v144
    %159 = vmatmul.bf16.gmra.mxu0 %v149
    %v160 = vpop.f32.mrf.mxu0
    %v161 = vadd.f32 %v134, %v160
    %v162 = vpop.f32.mrf.mxu0
    %163 = vdwg.mxu0
    %vm164 = vcmask 130048
    %165 = vst.msk [vmem:[#allocation4] sm:$0xff] %vm164, %v161
    // Predicated region
    $region30: #{tpu_custom_call.1} parent=1 // pred_check
      _
    $region31: #{tpu_custom_call.1} parent=1 // pred_check_branch
      %167 = sbr.rel (0) target = $region33
    $region32: #{tpu_custom_call.1} parent=1 // pred_region
      %169 = vsyncadd [#allocation3], 0
      %s171 = sshll.u32 [#allocation2], 4
      %s172 = int_to_ptr.vmem [resolvable:$true] %s171
      %s173 = sshll.u32 %s7, 4
      %s174 = int_to_ptr.hbm [resolvable:$true] %s173
      %176 = dma.vmem_to_hbm [thread:$0]  %s172, 128, %s174, [#allocation3]
    $region33: #{tpu_custom_call.1} parent=1 // pred_fallthru
      _
    // Predicated region
    $region34: #{tpu_custom_call.1} parent=1 // pred_check
      _
    $region35: #{tpu_custom_call.1} parent=1 // pred_check_branch
      %178 = sbr.rel (0) target = $region37
    $region36: #{tpu_custom_call.1} parent=1 // pred_region
      %180 = vsyncadd [#allocation5], 0
      %s182 = sshll.u32 [#allocation4], 4
      %s183 = int_to_ptr.vmem [resolvable:$true] %s182
      %s184 = sshll.u32 %s8, 4
      %s185 = int_to_ptr.hbm [resolvable:$true] %s184
      %187 = dma.vmem_to_hbm [thread:$0]  %s183, 128, %s185, [#allocation5]
    $region37: #{tpu_custom_call.1} parent=1 // pred_fallthru
      _
    // Predicated region
    $region38: #{tpu_custom_call.1} parent=1 // pred_check
      _
    $region39: #{tpu_custom_call.1} parent=1 // pred_check_branch
      %189 = sbr.rel (0) target = $region41
    $region40: #{tpu_custom_call.1} parent=1 // pred_region
      %191 = dma.done [#allocation3], 128
    $region41: #{tpu_custom_call.1} parent=1 // pred_fallthru
      _
    // Predicated region
    $region42: #{tpu_custom_call.1} parent=1 // pred_check
      _
    $region43: #{tpu_custom_call.1} parent=1 // pred_check_branch
      %193 = sbr.rel (0) target = $region45
    $region44: #{tpu_custom_call.1} parent=1 // pred_region
      %195 = dma.done [#allocation5], 128
    $region45: #{tpu_custom_call.1} parent=1 // pred_fallthru
      _
    %196 = vsyncpa [#allocation3], 1
    %197 = vsyncpa [#allocation5], 1

</llo_original>
